<compile_context>
chip_gen: v6e
topology: v6e:2x2x1
jax: 0.10.0
libtpu: 0.0.40
codegen_flags: <defaults>
</compile_context>

<pallas_src>
from functools import partial

import jax
import jax.numpy as jnp
from jax.experimental import pallas as pl
from jax.experimental.pallas import tpu as pltpu

LN_EPS = 1e-5


# ---------------------------------------------------------------------------
# Helpers.
# ---------------------------------------------------------------------------
def _vmem_info():
    """Returns (physical VMEM bytes, vmem_limit_bytes to request).

    Leaves ~1/8 headroom for Mosaic-internal scratch: ~112 MiB on v5e/v6e
    (128 MiB physical), ~56 MiB on v7x (64 MiB physical).
    """
    cap = 128 * 1024 * 1024
    try:
        info = pltpu.get_tpu_info()
        cap = int(getattr(info, "vmem_capacity_bytes", cap) or cap)
    except Exception:
        pass
    return cap, min(cap - cap // 8, 112 * 1024 * 1024)


def _spec(shape, index_map, *, buffers=None):
    """BlockSpec with an optional explicit pipeline buffer count.

    buffers=1 single-buffers constant-index weight blocks (only DMA'd once);
    buffers>=3 deepens pipelining on streamed axes.  Falls back to the default
    double-buffered spec on jax versions without BlockSpec(pipeline_mode=...).
    """
    if buffers is not None and hasattr(pl, "Buffered"):
        try:
            return pl.BlockSpec(shape, index_map, pipeline_mode=pl.Buffered(buffers))
        except TypeError:
            pass
    return pl.BlockSpec(shape, index_map)


def _const_spec(shape):
    """Full-array, single-buffered block with a constant index map (weights)."""
    nd = len(shape)
    return _spec(shape, lambda *a: (0,) * nd, buffers=1)


def _layernorm_f32(v, w, b):
    """fp16-safe LayerNorm: statistics and affine in float32."""
    v32 = v.astype(jnp.float32)
    mu = jnp.mean(v32, axis=-1, keepdims=True)
    var = jnp.mean((v32 - mu) ** 2, axis=-1, keepdims=True)
    return (v32 - mu) * jax.lax.rsqrt(var + LN_EPS) * w + b


# ---------------------------------------------------------------------------
# Kernel 1: LN1 + fused QKV projection -> lane-dense (B, S, 3C) bf16.
# (attention scale is pre-folded into the Q columns of Wqkv / bias)
# ---------------------------------------------------------------------------
def _ln1_qkv_kernel(x_ref, ln1_w_ref, ln1_b_ref, qkv_w_ref, qkv_b_ref, qkv_ref):
    xn = _layernorm_f32(x_ref[0], ln1_w_ref[0], ln1_b_ref[0])            # (TS, C) f32
    y = jnp.dot(xn.astype(jnp.bfloat16), qkv_w_ref[...],
                preferred_element_type=jnp.float32) + qkv_b_ref[0]       # (TS, 3C) f32
    qkv_ref[0] = y.astype(qkv_ref.dtype)                                 # lane-dense store


def _ln1_qkv(x, params, *, tile_s, vmem_limit):
    B, S, C = x.shape
    flops = 2 * B * S * C * 3 * C
    bytes_accessed = int(B * S * C * x.dtype.itemsize + 3 * B * S * C * 2
                         + C * 3 * C * 2 + 5 * C * 4)
    return pl.pallas_call(
        _ln1_qkv_kernel,
        out_shape=jax.ShapeDtypeStruct((B, S, 3 * C), jnp.bfloat16),
        grid_spec=pltpu.PrefetchScalarGridSpec(
            num_scalar_prefetch=0,
            grid=(B, S // tile_s),
            in_specs=[
                _spec((1, tile_s, C), lambda b, s: (b, s, 0)),            # x
                _const_spec((1, C)), _const_spec((1, C)),                 # ln1 w, b
                _const_spec((C, 3 * C)), _const_spec((1, 3 * C)),         # Wqkv, b
            ],
            out_specs=_spec((1, tile_s, 3 * C), lambda b, s: (b, s, 0)),
        ),
        compiler_params=pltpu.CompilerParams(
            dimension_semantics=("parallel", "parallel"),
            vmem_limit_bytes=vmem_limit),
        cost_estimate=pl.CostEstimate(flops=flops, transcendentals=B * S,
                                      bytes_accessed=bytes_accessed),
    )(x, params["ln1_w"], params["ln1_b"], params["qkv_w"], params["qkv_b"])


# ---------------------------------------------------------------------------
# Kernel 2: flash attention (online softmax over KV tiles) + out-proj +
#           residual-1 + LN2 + MLP + residual-2, per query tile.
# ---------------------------------------------------------------------------
def _attn_mlp_kernel(x_ref, q_ref, kt_ref, v_ref,
                     out_w_ref, out_b_ref,
                     ln2_w_ref, ln2_b_ref,
                     fc_w_ref, fc_b_ref,
                     proj_w_ref, proj_b_ref,
                     o_ref,
                     m_scr, l_scr, acc_scr):
    ki = pl.program_id(2)

    @pl.when(ki == 0)
    def _init():
        m_scr[...] = jnp.full_like(m_scr, -jnp.inf)
        l_scr[...] = jnp.zeros_like(l_scr)
        acc_scr[...] = jnp.zeros_like(acc_scr)

    q = q_ref[0]                       # (H, TQ, D) bf16, scale already folded in
    kt = kt_ref[0]                     # (H, D, TK) bf16, lane-dense
    v = v_ref[0]                       # (H, TK, D) bf16

    # Scores for this KV tile; f32 accumulation on the MXU. No in-kernel
    # transpose of K is needed since it is stored (H, D, TK).
    s = jnp.einsum("hqd,hdk->hqk", q, kt,
                   preferred_element_type=jnp.float32)                   # (H,TQ,TK)

    m_prev = m_scr[...]
    m_new = jnp.maximum(m_prev, jnp.max(s, axis=-1, keepdims=True))
    alpha = jnp.exp(m_prev - m_new)
    p = jnp.exp(s - m_new)                                               # unnormalized
    l_scr[...] = alpha * l_scr[...] + jnp.sum(p, axis=-1, keepdims=True)
    acc_scr[...] = alpha * acc_scr[...] + jnp.einsum(
        "hqk,hkd->hqd", p.astype(v.dtype), v,
        preferred_element_type=jnp.float32)
    m_scr[...] = m_new

    @pl.when(ki == pl.num_programs(2) - 1)
    def _finish():
        acc = acc_scr[...]                                               # (H,TQ,D) f32
        h, tq, d = acc.shape
        attn = acc * pl.reciprocal(l_scr[...], approx=True)              # deferred norm
        attn = jnp.swapaxes(attn, 0, 1).reshape(tq, h * d)               # (TQ, C)
        attn = jnp.dot(attn.astype(jnp.bfloat16), out_w_ref[...],
                       preferred_element_type=jnp.float32) + out_b_ref[0]
        x1 = x_ref[0].astype(jnp.float32) + attn                         # residual 1
        xn2 = _layernorm_f32(x1, ln2_w_ref[0], ln2_b_ref[0])
        h1 = jnp.dot(xn2.astype(jnp.bfloat16), fc_w_ref[...],
                     preferred_element_type=jnp.float32) + fc_b_ref[0]
        h1 = jax.nn.gelu(h1, approximate=False)                          # exact erf GELU
        h2 = jnp.dot(h1.astype(jnp.bfloat16), proj_w_ref[...],
                     preferred_element_type=jnp.float32) + proj_b_ref[0]
        o_ref[0] = (x1 + h2).astype(o_ref.dtype)                         # residual 2


def _attn_mlp(x, q, kt, v, params, *, num_heads, head_dim, tile_q, tile_kv,
              vmem_limit, kv_buffers=None):
    B, S, C = x.shape
    hidden = params["fc_w"].shape[1]
    n_q = S // tile_q
    flops = 4 * B * S * S * C + 2 * B * S * C * C + 4 * B * S * C * hidden
    transcendentals = B * num_heads * S * S + B * S * hidden
    bytes_accessed = int(2 * B * S * C * x.dtype.itemsize
                         + B * S * C * 2                          # q
                         + n_q * 2 * B * S * C * 2                # K/V restream
                         + (C * C + 2 * C * hidden) * 2)
    return pl.pallas_call(
        _attn_mlp_kernel,
        out_shape=jax.ShapeDtypeStruct((B, S, C), x.dtype),
        grid_spec=pltpu.PrefetchScalarGridSpec(
            num_scalar_prefetch=0,
            grid=(B, n_q, S // tile_kv),
            in_specs=[
                _spec((1, tile_q, C), lambda b, qi, ki: (b, qi, 0)),     # x
                _spec((1, num_heads, tile_q, head_dim),
                      lambda b, qi, ki: (b, 0, qi, 0)),                  # q (H,TQ,D)
                _spec((1, num_heads, head_dim, tile_kv),
                      lambda b, qi, ki: (b, 0, 0, ki),
                      buffers=kv_buffers),                               # k^T (H,D,TK)
                _spec((1, num_heads, tile_kv, head_dim),
                      lambda b, qi, ki: (b, 0, ki, 0),
                      buffers=kv_buffers),                               # v (H,TK,D)
                _const_spec((C, C)), _const_spec((1, C)),                # Wout, b
                _const_spec((1, C)), _const_spec((1, C)),                # ln2 w, b
                _const_spec((C, hidden)), _const_spec((1, hidden)),      # Wfc, b
                _const_spec((hidden, C)), _const_spec((1, C)),           # Wproj, b
            ],
            out_specs=_spec((1, tile_q, C), lambda b, qi, ki: (b, qi, 0)),
            scratch_shapes=[
                pltpu.VMEM((num_heads, tile_q, 1), jnp.float32),         # running max
                pltpu.VMEM((num_heads, tile_q, 1), jnp.float32),         # running sum
                pltpu.VMEM((num_heads, tile_q, head_dim), jnp.float32),  # PV acc
            ],
        ),
        compiler_params=pltpu.CompilerParams(
            dimension_semantics=("parallel", "parallel", "arbitrary"),
            vmem_limit_bytes=vmem_limit),
        cost_estimate=pl.CostEstimate(
            flops=flops, transcendentals=transcendentals,
            bytes_accessed=bytes_accessed),
    )(x, q, kt, v,
      params["out_w"], params["out_b"],
      params["ln2_w"], params["ln2_b"],
      params["fc_w"], params["fc_b"],
      params["proj_w"], params["proj_b"])


# ---------------------------------------------------------------------------
# Public wrapper.
# ---------------------------------------------------------------------------
def residual_attention_block(x_nhwc, params, *, num_heads: int,
                             tile_s=None, tile_q=None, tile_kv=None,
                             kv_buffers=None):
    """x_nhwc: (B, H, W, C) -> (B, H, W, C); params from prepare_params().

    The output keeps x's dtype; pass bf16 x on memory-bound chips (v5e) to
    halve residual-stream HBM traffic (residual/LN math stays f32 in-kernel).
    """
    B, H, W, C = x_nhwc.shape
    S = H * W
    assert C % num_heads == 0
    head_dim = C // num_heads

    vmem_cap, vmem_limit = _vmem_info()
    small_vmem = vmem_cap <= 64 * 1024 * 1024          # v7x-class per-TC VMEM
    default_tile = 256 if (small_vmem and C >= 1024) else 512

    def _pick(t, default):
        t = min(default, S) if t is None else t
        assert S % t == 0, f"S={S} must be divisible by tile={t}"
        return t

    tile_s = _pick(tile_s, default_tile)
    tile_q = _pick(tile_q, default_tile)
    tile_kv = _pick(tile_kv, default_tile)
    assert tile_kv == S or tile_kv % 128 == 0, "tile_kv must be lane-aligned (x128) or == S"
    assert tile_q == S or tile_q % 8 == 0
    assert tile_s == S or tile_s % 8 == 0

    x = x_nhwc.reshape(B, S, C)
    qkv = _ln1_qkv(x, params, tile_s=tile_s, vmem_limit=vmem_limit)      # (B,S,3C) bf16

    # Head-major split/transpose once at the XLA level (keeps kernel 1 free of
    # cross-tile reshapes/swapaxes and its stores lane-dense).  K is stored
    # pre-transposed (B, H, D, S) so kernel 2's K blocks are lane-dense.
    qkv = qkv.reshape(B, S, 3, num_heads, head_dim)
    q = jnp.transpose(qkv[:, :, 0], (0, 2, 1, 3))      # (B, H, S, D), pre-scaled
    kt = jnp.transpose(qkv[:, :, 1], (0, 2, 3, 1))     # (B, H, D, S)
    v = jnp.transpose(qkv[:, :, 2], (0, 2, 1, 3))      # (B, H, S, D)

    y = _attn_mlp(x, q, kt, v, params, num_heads=num_heads, head_dim=head_dim,
                  tile_q=tile_q, tile_kv=tile_kv, vmem_limit=vmem_limit,
                  kv_buffers=kv_buffers)
    return y.reshape(B, H, W, C)


# ---------------------------------------------------------------------------
# Parameters: canonical (PyTorch layout, f32) and kernel-ready (pre-transposed
# bf16 weights, f32 biases / LN params, attention scale folded into Wq / bq).
# ---------------------------------------------------------------------------
def init_canonical_params(key, d_model: int, mlp_ratio: float = 4.0):
    hidden = int(d_model * mlp_ratio)
    ks = jax.random.split(key, 8)
    s = 0.02
    f32 = jnp.float32
    return {
        "ln1_w": jnp.ones((d_model,), f32),
        "ln1_b": jnp.zeros((d_model,), f32),
        "in_proj_weight": s * jax.random.normal(ks[0], (3 * d_model, d_model), f32),
        "in_proj_bias": s * jax.random.normal(ks[1], (3 * d_model,), f32),
        "out_proj_weight": s * jax.random.normal(ks[2], (d_model, d_model), f32),
        "out_proj_bias": s * jax.random.normal(ks[3], (d_model,), f32),
        "ln2_w": jnp.ones((d_model,), f32),
        "ln2_b": jnp.zeros((d_model,), f32),
        "c_fc_weight": s * jax.random.normal(ks[4], (hidden, d_model), f32),
        "c_fc_bias": s * jax.random.normal(ks[5], (hidden,), f32),
        "c_proj_weight": s * jax.random.normal(ks[6], (d_model, hidden), f32),
        "c_proj_bias": s * jax.random.normal(ks[7], (d_model,), f32),
    }


def prepare_params(canon, num_heads: int):
    bf16, f32 = jnp.bfloat16, jnp.float32
    d_model = canon["ln1_w"].shape[0]
    head_dim = d_model // num_heads
    scale = head_dim ** (-0.5)
    row = lambda a: a.reshape(1, -1).astype(f32)
    # Fold the attention scale into the Q rows of the fused projection so the
    # kernels never multiply by it.
    w_qkv = canon["in_proj_weight"].astype(f32).at[:d_model].multiply(scale)
    b_qkv = canon["in_proj_bias"].astype(f32).at[:d_model].multiply(scale)
    return {
        "ln1_w": row(canon["ln1_w"]), "ln1_b": row(canon["ln1_b"]),
        "qkv_w": w_qkv.T.astype(bf16),                  # (C, 3C) contraction-major
        "qkv_b": b_qkv.reshape(1, -1),
        "out_w": canon["out_proj_weight"].T.astype(bf16),   # (C, C)
        "out_b": row(canon["out_proj_bias"]),
        "ln2_w": row(canon["ln2_w"]), "ln2_b": row(canon["ln2_b"]),
        "fc_w": canon["c_fc_weight"].T.astype(bf16),        # (C, 4C)
        "fc_b": row(canon["c_fc_bias"]),
        "proj_w": canon["c_proj_weight"].T.astype(bf16),    # (4C, C)
        "proj_b": row(canon["c_proj_bias"]),
    }


def _reference(x_nhwc, canon, *, num_heads: int):
    """Pure-JAX float32 reference of the same forward."""
    B, H, W, C = x_nhwc.shape
    S = H * W
    D = C // num_heads
    x = x_nhwc.reshape(B, S, C).astype(jnp.float32)

    def ln(v, w, b):
        mu = jnp.mean(v, -1, keepdims=True)
        var = jnp.mean((v - mu) ** 2, -1, keepdims=True)
        return (v - mu) * jax.lax.rsqrt(var + LN_EPS) * w + b

    xn = ln(x, canon["ln1_w"], canon["ln1_b"])
    qkv = xn @ canon["in_proj_weight"].T + canon["in_proj_bias"]
    q, k, v = jnp.split(qkv, 3, axis=-1)
    q = q.reshape(B, S, num_heads, D).transpose(0, 2, 1, 3) * (D ** -0.5)
    k = k.reshape(B, S, num_heads, D).transpose(0, 2, 1, 3)
    v = v.reshape(B, S, num_heads, D).transpose(0, 2, 1, 3)
    attn = jax.nn.softmax(jnp.einsum("bhqd,bhkd->bhqk", q, k), axis=-1)
    o = jnp.einsum("bhqk,bhkd->bhqd", attn, v)
    o = o.transpose(0, 2, 1, 3).reshape(B, S, C)
    o = o @ canon["out_proj_weight"].T + canon["out_proj_bias"]
    x1 = x + o
    xn2 = ln(x1, canon["ln2_w"], canon["ln2_b"])
    h1 = jax.nn.gelu(xn2 @ canon["c_fc_weight"].T + canon["c_fc_bias"],
                     approximate=False)
    h2 = h1 @ canon["c_proj_weight"].T + canon["c_proj_bias"]
    return (x1 + h2).reshape(B, H, W, C)


if __name__ == "__main__":
    key = jax.random.PRNGKey(0)
    kx, kp = jax.random.split(key)

    # Small but tile-aligned: S = 16*16 = 256 tokens, C = 128 (one lane width),
    # 4 heads of D = 32, MLP hidden = 512.  Tiles of 128 give a (2, 2, 2) flash
    # grid so the query-tile and KV-reduction (online softmax) paths are both
    # exercised, and every block is lane-aligned.
    B, Hs, Ws, d_model, n_head = 2, 16, 16, 128, 4
    x = jax.random.normal(kx, (B, Hs, Ws, d_model), jnp.float32)

    canon = init_canonical_params(kp, d_model)
    params = prepare_params(canon, num_heads=n_head)

    out = residual_attention_block(x, params, num_heads=n_head,
                                   tile_s=128, tile_q=128, tile_kv=128)
    out = jax.block_until_ready(out)

    ref = _reference(x, canon, num_heads=n_head)
    assert out.shape == (B, Hs, Ws, d_model)
    max_err = float(jnp.max(jnp.abs(out - ref)))
    assert jnp.allclose(out, ref, atol=5e-2, rtol=5e-2), (
        f"mismatch vs reference, max abs err {max_err}")
    print("KERNEL_OK")
</pallas_src>

<mosaic_0001>
module attributes {stable_mosaic.version = 11 : i64} {
  func.func @_ln1_qkv_kernel(%arg0: i32, %arg1: i32, %arg2: memref<1x128x128xf32, #tpu.memory_space<vmem>>, %arg3: memref<1x128xf32, #tpu.memory_space<vmem>>, %arg4: memref<1x128xf32, #tpu.memory_space<vmem>>, %arg5: memref<128x384xbf16, #tpu.memory_space<vmem>>, %arg6: memref<1x384xf32, #tpu.memory_space<vmem>>, %arg7: memref<1x128x384xbf16, #tpu.memory_space<vmem>>) attributes {dimension_semantics = [#tpu.dimension_semantics<parallel>, #tpu.dimension_semantics<parallel>], iteration_bounds = array<i64: 2, 2>, scalar_prefetch = 0 : i64, scratch_operands = 0 : i64, tpu.core_type = #tpu.core_type<tc>, window_params = [{transform_indices = @transform_0, window_bounds = array<i64: 1, 128, 128>}, {pipeline_mode = #tpu.pipeline_mode<synchronous>, transform_indices = @transform_1, window_bounds = array<i64: 1, 128>}, {pipeline_mode = #tpu.pipeline_mode<synchronous>, transform_indices = @transform_2, window_bounds = array<i64: 1, 128>}, {pipeline_mode = #tpu.pipeline_mode<synchronous>, transform_indices = @transform_3, window_bounds = array<i64: 128, 384>}, {pipeline_mode = #tpu.pipeline_mode<synchronous>, transform_indices = @transform_4, window_bounds = array<i64: 1, 384>}, {transform_indices = @transform_5, window_bounds = array<i64: 1, 128, 384>}]} {
    %c0 = arith.constant 0 : index
    %c0_0 = arith.constant 0 : index
    %c0_1 = arith.constant 0 : index
    %0 = vector.load %arg2[%c0, %c0_0, %c0_1] : memref<1x128x128xf32, #tpu.memory_space<vmem>>, vector<1x128x128xf32>
    %1 = vector.shape_cast %0 : vector<1x128x128xf32> to vector<128x128xf32>
    %c0_2 = arith.constant 0 : index
    %c0_3 = arith.constant 0 : index
    %2 = vector.load %arg3[%c0_2, %c0_3] : memref<1x128xf32, #tpu.memory_space<vmem>>, vector<1x128xf32>
    %3 = vector.shape_cast %2 : vector<1x128xf32> to vector<128xf32>
    %c0_4 = arith.constant 0 : index
    %c0_5 = arith.constant 0 : index
    %4 = vector.load %arg4[%c0_4, %c0_5] : memref<1x128xf32, #tpu.memory_space<vmem>>, vector<1x128xf32>
    %5 = vector.shape_cast %4 : vector<1x128xf32> to vector<128xf32>
    %cst = arith.constant dense<0.000000e+00> : vector<128xf32>
    %6 = vector.multi_reduction <add>, %1, %cst [1] : vector<128x128xf32> to vector<128xf32>
    %7 = vector.shape_cast %6 : vector<128xf32> to vector<128x1xf32>
    %cst_6 = arith.constant 1.280000e+02 : f32
    %8 = vector.broadcast %cst_6 : f32 to vector<128x1xf32>
    %9 = arith.divf %7, %8 : vector<128x1xf32>
    %10 = vector.broadcast %9 : vector<128x1xf32> to vector<128x128xf32>
    %11 = arith.subf %1, %10 : vector<128x128xf32>
    %12 = arith.mulf %11, %11 : vector<128x128xf32>
    %cst_7 = arith.constant dense<0.000000e+00> : vector<128xf32>
    %13 = vector.multi_reduction <add>, %12, %cst_7 [1] : vector<128x128xf32> to vector<128xf32>
    %14 = vector.shape_cast %13 : vector<128xf32> to vector<128x1xf32>
    %cst_8 = arith.constant 1.280000e+02 : f32
    %15 = vector.broadcast %cst_8 : f32 to vector<128x1xf32>
    %16 = arith.divf %14, %15 : vector<128x1xf32>
    %17 = vector.broadcast %9 : vector<128x1xf32> to vector<128x128xf32>
    %18 = arith.subf %1, %17 : vector<128x128xf32>
    %cst_9 = arith.constant 9.99999974E-6 : f32
    %19 = vector.broadcast %cst_9 : f32 to vector<128x1xf32>
    %20 = arith.addf %16, %19 : vector<128x1xf32>
    %21 = math.rsqrt %20 : vector<128x1xf32>
    %22 = vector.broadcast %21 : vector<128x1xf32> to vector<128x128xf32>
    %23 = arith.mulf %18, %22 : vector<128x128xf32>
    %24 = vector.shape_cast %3 : vector<128xf32> to vector<1x128xf32>
    %25 = vector.broadcast %24 : vector<1x128xf32> to vector<128x128xf32>
    %26 = arith.mulf %23, %25 : vector<128x128xf32>
    %27 = vector.shape_cast %5 : vector<128xf32> to vector<1x128xf32>
    %28 = vector.broadcast %27 : vector<1x128xf32> to vector<128x128xf32>
    %29 = arith.addf %26, %28 : vector<128x128xf32>
    %30 = arith.truncf %29 : vector<128x128xf32> to vector<128x128xbf16>
    %c0_10 = arith.constant 0 : index
    %c0_11 = arith.constant 0 : index
    %31 = vector.load %arg5[%c0_10, %c0_11] : memref<128x384xbf16, #tpu.memory_space<vmem>>, vector<128x384xbf16>
    %cst_12 = arith.constant dense<0.000000e+00> : vector<128x384xf32>
    %32 = tpu.matmul %30, %31, %cst_12 {dimension_numbers = #tpu.dot_dimension_numbers<[1], [0], [0], [1], [0, 0, 1, 1], [], []>} : vector<128x128xbf16>, vector<128x384xbf16>, vector<128x384xf32> -> vector<128x384xf32>
    %c0_13 = arith.constant 0 : index
    %c0_14 = arith.constant 0 : index
    %33 = vector.load %arg6[%c0_13, %c0_14] : memref<1x384xf32, #tpu.memory_space<vmem>>, vector<1x384xf32>
    %34 = vector.shape_cast %33 : vector<1x384xf32> to vector<384xf32>
    %35 = vector.shape_cast %34 : vector<384xf32> to vector<1x384xf32>
    %36 = vector.broadcast %35 : vector<1x384xf32> to vector<128x384xf32>
    %37 = arith.addf %32, %36 : vector<128x384xf32>
    %38 = arith.truncf %37 : vector<128x384xf32> to vector<128x384xbf16>
    %c0_15 = arith.constant 0 : index
    %c0_16 = arith.constant 0 : index
    %c0_17 = arith.constant 0 : index
    %39 = vector.load %arg7[%c0_15, %c0_16, %c0_17] : memref<1x128x384xbf16, #tpu.memory_space<vmem>>, vector<1x128x384xbf16>
    %40 = vector.shape_cast %39 : vector<1x128x384xbf16> to vector<128x384xbf16>
    %41 = vector.shape_cast %38 : vector<128x384xbf16> to vector<1x128x384xbf16>
    tpu.vector_store %arg7[%c0_15, %c0_16, %c0_17], %41 {strides = array<i32>} : memref<1x128x384xbf16, #tpu.memory_space<vmem>>, vector<1x128x384xbf16>,
    return
  }
  func.func @transform_0(%arg0: i32, %arg1: i32) -> (i32, i32, i32) {
    %c0_i32 = arith.constant 0 : i32
    %c0_i32_0 = arith.constant 0 : i32
    return %arg0, %arg1, %c0_i32 : i32, i32, i32
  }
  func.func @transform_1(%arg0: i32, %arg1: i32) -> (i32, i32) {
    %c0_i32 = arith.constant 0 : i32
    %c0_i32_0 = arith.constant 0 : i32
    %c0_i32_1 = arith.constant 0 : i32
    return %c0_i32, %c0_i32_0 : i32, i32
  }
  func.func @transform_2(%arg0: i32, %arg1: i32) -> (i32, i32) {
    %c0_i32 = arith.constant 0 : i32
    %c0_i32_0 = arith.constant 0 : i32
    %c0_i32_1 = arith.constant 0 : i32
    return %c0_i32, %c0_i32_0 : i32, i32
  }
  func.func @transform_3(%arg0: i32, %arg1: i32) -> (i32, i32) {
    %c0_i32 = arith.constant 0 : i32
    %c0_i32_0 = arith.constant 0 : i32
    %c0_i32_1 = arith.constant 0 : i32
    return %c0_i32, %c0_i32_0 : i32, i32
  }
  func.func @transform_4(%arg0: i32, %arg1: i32) -> (i32, i32) {
    %c0_i32 = arith.constant 0 : i32
    %c0_i32_0 = arith.constant 0 : i32
    %c0_i32_1 = arith.constant 0 : i32
    return %c0_i32, %c0_i32_0 : i32, i32
  }
  func.func @transform_5(%arg0: i32, %arg1: i32) -> (i32, i32, i32) {
    %c0_i32 = arith.constant 0 : i32
    %c0_i32_0 = arith.constant 0 : i32
    return %arg0, %arg1, %c0_i32 : i32, i32, i32
  }
}

</mosaic_0001>

<llo_original>
// kernel: tpu_custom_call.1
$region0: #{tpu_custom_call.1}
  #allocation0 [shape = 'u32[]', space=smem, size = 0x4, offset = 0x4, fixed_abs, tag = 'smem constant byte address 0x4 - core index']
  #allocation1 [shape = 'u32[144,128]{1,0:T(1,128)}', space=vmem, size = 0x12000, scoped, tag = 'internal scratch']
  %s0 = inlined_call_operand.hbm [shape: f32[2,256,128], index: 0, kind: input, shape index: {}]
  %s1 = inlined_call_operand.vmem [shape: f32[1,128], index: 1, kind: input, shape index: {}]
  %s2 = inlined_call_operand.vmem [shape: f32[1,128], index: 2, kind: input, shape index: {}]
  %s3 = inlined_call_operand.hbm [shape: bf16[128,384], index: 3, kind: input, shape index: {}]
  %s4 = inlined_call_operand.vmem [shape: f32[1,384], index: 4, kind: input, shape index: {}]
  %s5 = inlined_call_operand.hbm [shape: bf16[2,256,384], index: 5, kind: output, shape index: {}]
  %s6 = sld [smem:[#allocation0]]
  $region61: #{tpu_custom_call.1} parent=0
    _
  %s8 = ssub.s32 1, %s6
  %s9 = scalar_select 0, %s8, %s6
  $region1: #{tpu_custom_call.1} parent=0
    #allocation2 [shape = 'u8[131072]{0}', space=vmem, size = 0x20000, scoped, tag = 'input window, operand 0']
    #allocation3 [shape = 's32[2]{0}', space=sflag, size = 0x8, scoped, tag = 'scoped memory for tpu_custom_call.1']
    #allocation4 [shape = 's32[2]{0}', space=sflag, size = 0x8, scoped, tag = 'scoped memory for tpu_custom_call.1']
    #allocation5 [shape = 'u8[98304]{0}', space=vmem, size = 0x18000, scoped, tag = 'input window, operand 3, single buffered']
    #allocation6 [shape = 's32[1]{0}', space=sflag, size = 0x4, scoped, tag = 'scoped memory for tpu_custom_call.1']
    #allocation7 [shape = 'u8[196608]{0}', space=vmem, size = 0x30000, scoped, tag = 'output window, operand 0']
    %10 = vsyncpa [#allocation3], 0
    %s11 = scalar_lea.sflag [#allocation3], 1
    %12 = vsyncpa %s11, 0
    %13 = vsyncpa [#allocation6], 0
    %14 = vsyncpa [#allocation4], 0
    %s15 = scalar_lea.sflag [#allocation4], 1
    %16 = vsyncpa %s15, 0
    loop: start=0, step=1, limit=6
    $region2: #{tpu_custom_call.1} parent=1 // loop_pre_header
      _
    $region3: #{tpu_custom_call.1} parent=1 // loop_header
      %s18 = sphi 0, %s22
      %p19 = scmp.ge.s32.totalorder %s18, 6
      %s25 = sphi 0, %s37
      %s26 = sphi 0, %s33
      %s27 = sphi 0, %s25
      %s28 = sphi 0, %s26
      %s29 = sphi 0, %s27
      %s30 = sphi 0, %s28
      %s42 = sphi 0, %s44
      %s45 = sphi 0, %s42
      %s46 = sphi 0, %s45
      %s62 = sphi 0, %s46
      %s66 = sphi 0, %s66
      %s68 = sphi 0, %s66
      %s69 = sphi 0, %s68
      %s83 = sphi 0, %s69
      %s87 = sphi 0, %s87
      %s89 = sphi 0, %s87
      %s90 = sphi 0, %s89
      %s104 = sphi 0, %s90
      %s108 = sphi 0, %s108
      %s110 = sphi 0, %s108
      %s111 = sphi 0, %s110
      %s125 = sphi 0, %s111
      %s129 = sphi 0, %s129
      %s131 = sphi 0, %s129
      %s132 = sphi 0, %s131
      %s146 = sphi 0, %s132
      %s154 = sphi 0, %s156
      %s157 = sphi 0, %s154
      %s158 = sphi 0, %s157
      %s174 = sphi 0, %s158
    $region4: #{tpu_custom_call.1} parent=1 // loop_header_branch
      %21 = sbr.rel (%p19) target = $region8
    $region5: #{tpu_custom_call.1} parent=1 // loop_body
      %s23 = ssub.s32 %s18, 1
      %s24 = ssub.s32 %s18, 2
      %s31 = sadd.s32 1, %s26
      %p32 = scmp.ge.s32.totalorder %s31, 2
      %s33 = scalar_select %p32, 0, %s31
      %s34 = sadd.s32 1, %s25
      %s35 = scalar_select %p32, %s34, %s25
      %p36 = scmp.ge.s32.totalorder %s35, 2
      %s37 = scalar_select %p36, 0, %s35
      %s38 = ssub.s32 %s25, %s37
      %s39 = ssub.s32 %s26, %s33
      %s40 = sor.u32 %s38, %s39
      %p41 = scmp.eq.s32.totalorder %s40, 0
      %s43 = sadd.s32 %s42, 1
      %s44 = scalar_select %p41, %s42, %s43
      %p47 = pneg %p41
      %p48 = scmp.eq.s32.totalorder %s18, 3
      %p49 = por %p47, %p48
      %p50 = scmp.ne.s32.totalorder %s42, %s45
      %p51 = scmp.eq.s32.totalorder %s18, 0
      %p52 = por %p50, %p51
      %p53 = scmp.ne.s32.totalorder %s42, %s45
      %p54 = scmp.eq.s32.totalorder %s23, 3
      %p55 = por %p53, %p54
      %p56 = scmp.ne.s32.totalorder %s45, %s46
      %p57 = scmp.eq.s32.totalorder %s23, 0
      %p58 = por %p56, %p57
      %p59 = scmp.ne.s32.totalorder %s45, %s46
      %p60 = scmp.eq.s32.totalorder %s24, 3
      %p61 = por %p59, %p60
      %p63 = scmp.ne.s32.totalorder %s46, %s62
      %p64 = scmp.eq.s32.totalorder %s24, 0
      %p65 = por %p63, %p64
      %s67 = sadd.s32 %s66, 1
      %p70 = scmp.eq.s32.totalorder %s18, 3
      %p71 = scmp.ne.s32.totalorder %s66, %s68
      %p72 = scmp.eq.s32.totalorder %s18, 0
      %p73 = por %p71, %p72
      %p74 = scmp.ne.s32.totalorder %s66, %s68
      %p75 = scmp.eq.s32.totalorder %s23, 3
      %p76 = por %p74, %p75
      %p77 = scmp.ne.s32.totalorder %s68, %s69
      %p78 = scmp.eq.s32.totalorder %s23, 0
      %p79 = por %p77, %p78
      %p80 = scmp.ne.s32.totalorder %s68, %s69
      %p81 = scmp.eq.s32.totalorder %s24, 3
      %p82 = por %p80, %p81
      %p84 = scmp.ne.s32.totalorder %s69, %s83
      %p85 = scmp.eq.s32.totalorder %s24, 0
      %p86 = por %p84, %p85
      %s88 = sadd.s32 %s87, 1
      %p91 = scmp.eq.s32.totalorder %s18, 3
      %p92 = scmp.ne.s32.totalorder %s87, %s89
      %p93 = scmp.eq.s32.totalorder %s18, 0
      %p94 = por %p92, %p93
      %p95 = scmp.ne.s32.totalorder %s87, %s89
      %p96 = scmp.eq.s32.totalorder %s23, 3
      %p97 = por %p95, %p96
      %p98 = scmp.ne.s32.totalorder %s89, %s90
      %p99 = scmp.eq.s32.totalorder %s23, 0
      %p100 = por %p98, %p99
      %p101 = scmp.ne.s32.totalorder %s89, %s90
      %p102 = scmp.eq.s32.totalorder %s24, 3
      %p103 = por %p101, %p102
      %p105 = scmp.ne.s32.totalorder %s90, %s104
      %p106 = scmp.eq.s32.totalorder %s24, 0
      %p107 = por %p105, %p106
      %s109 = sadd.s32 %s108, 1
      %p112 = scmp.eq.s32.totalorder %s18, 3
      %p113 = scmp.ne.s32.totalorder %s108, %s110
      %p114 = scmp.eq.s32.totalorder %s18, 0
      %p115 = por %p113, %p114
      %p116 = scmp.ne.s32.totalorder %s108, %s110
      %p117 = scmp.eq.s32.totalorder %s23, 3
      %p118 = por %p116, %p117
      %p119 = scmp.ne.s32.totalorder %s110, %s111
      %p120 = scmp.eq.s32.totalorder %s23, 0
      %p121 = por %p119, %p120
      %p122 = scmp.ne.s32.totalorder %s110, %s111
      %p123 = scmp.eq.s32.totalorder %s24, 3
      %p124 = por %p122, %p123
      %p126 = scmp.ne.s32.totalorder %s111, %s125
      %p127 = scmp.eq.s32.totalorder %s24, 0
      %p128 = por %p126, %p127
      %s130 = sadd.s32 %s129, 1
      %p133 = scmp.eq.s32.totalorder %s18, 3
      %p134 = scmp.ne.s32.totalorder %s129, %s131
      %p135 = scmp.eq.s32.totalorder %s18, 0
      %p136 = por %p134, %p135
      %p137 = scmp.ne.s32.totalorder %s129, %s131
      %p138 = scmp.eq.s32.totalorder %s23, 3
      %p139 = por %p137, %p138
      %p140 = scmp.ne.s32.totalorder %s131, %s132
      %p141 = scmp.eq.s32.totalorder %s23, 0
      %p142 = por %p140, %p141
      %p143 = scmp.ne.s32.totalorder %s131, %s132
      %p144 = scmp.eq.s32.totalorder %s24, 3
      %p145 = por %p143, %p144
      %p147 = scmp.ne.s32.totalorder %s132, %s146
      %p148 = scmp.eq.s32.totalorder %s24, 0
      %p149 = por %p147, %p148
      %s150 = ssub.s32 %s25, %s37
      %s151 = ssub.s32 %s26, %s33
      %s152 = sor.u32 %s150, %s151
      %p153 = scmp.eq.s32.totalorder %s152, 0
      %s155 = sadd.s32 %s154, 1
      %s156 = scalar_select %p153, %s154, %s155
      %p159 = pneg %p153
      %p160 = scmp.eq.s32.totalorder %s18, 3
      %p161 = por %p159, %p160
      %p162 = scmp.ne.s32.totalorder %s154, %s157
      %p163 = scmp.eq.s32.totalorder %s18, 0
      %p164 = por %p162, %p163
      %p165 = scmp.ne.s32.totalorder %s154, %s157
      %p166 = scmp.eq.s32.totalorder %s23, 3
      %p167 = por %p165, %p166
      %p168 = scmp.ne.s32.totalorder %s157, %s158
      %p169 = scmp.eq.s32.totalorder %s23, 0
      %p170 = por %p168, %p169
      %p171 = scmp.ne.s32.totalorder %s157, %s158
      %p172 = scmp.eq.s32.totalorder %s24, 3
      %p173 = por %p171, %p172
      %p175 = scmp.ne.s32.totalorder %s158, %s174
      %p176 = scmp.eq.s32.totalorder %s24, 0
      %p177 = por %p175, %p176
      %p178 = scmp.le.s32.totalorder 1, %s18
      %p179 = scmp.lt.s32.totalorder %s18, 5
      %p180 = pnand %p178, %p179
      %p181 = pneg %p180
      // Predicated region
      $region9: #{tpu_custom_call.1} parent=5 // pred_check
        _
      $region10: #{tpu_custom_call.1} parent=5 // pred_check_branch
        %183 = sbr.rel (%p180) target = $region12
      $region11: #{tpu_custom_call.1} parent=5 // pred_region
        %s184 = ssub.s32 %s18, 1
        // Predicated region
        $region13: #{tpu_custom_call.1} parent=11 // pred_check
          %p185 = pneg %p79
        $region14: #{tpu_custom_call.1} parent=11 // pred_check_branch
          %187 = sbr.rel (%p185) target = $region16
        $region15: #{tpu_custom_call.1} parent=11 // pred_region
          _
        $region16: #{tpu_custom_call.1} parent=11 // pred_fallthru
          _
        // Predicated region
        $region17: #{tpu_custom_call.1} parent=11 // pred_check
          %p188 = pneg %p100
        $region18: #{tpu_custom_call.1} parent=11 // pred_check_branch
          %190 = sbr.rel (%p188) target = $region20
        $region19: #{tpu_custom_call.1} parent=11 // pred_region
          _
        $region20: #{tpu_custom_call.1} parent=11 // pred_fallthru
          _
        // Predicated region
        $region21: #{tpu_custom_call.1} parent=11 // pred_check
          %p191 = pneg %p121
        $region22: #{tpu_custom_call.1} parent=11 // pred_check_branch
          %193 = sbr.rel (%p191) target = $region24
        $region23: #{tpu_custom_call.1} parent=11 // pred_region
          %s195 = ssub.s32 3072, 3072
          %196 = vsyncadd [#allocation6], %s195
          %s197 = sshll.u32 [#allocation5], 4
          %s198 = int_to_ptr.vmem [resolvable:$true] %s197
          %203 = dma.hbm_to_vmem [thread:$0]  %s3, 3072, %s198, [#allocation6], 192, 192, 12
        $region24: #{tpu_custom_call.1} parent=11 // pred_fallthru
          _
        // Predicated region
        $region25: #{tpu_custom_call.1} parent=11 // pred_check
          %p204 = pneg %p142
        $region26: #{tpu_custom_call.1} parent=11 // pred_check_branch
          %206 = sbr.rel (%p204) target = $region28
        $region27: #{tpu_custom_call.1} parent=11 // pred_region
          _
        $region28: #{tpu_custom_call.1} parent=11 // pred_fallthru
          _
      $region12: #{tpu_custom_call.1} parent=5 // pred_fallthru
        _
      %p207 = scmp.lt.s32.totalorder %s18, 4
      // Predicated region
      $region29: #{tpu_custom_call.1} parent=5 // pred_check
        %p208 = pneg %p207
      $region30: #{tpu_custom_call.1} parent=5 // pred_check_branch
        %210 = sbr.rel (%p208) target = $region32
      $region31: #{tpu_custom_call.1} parent=5 // pred_region
        // Predicated region
        $region33: #{tpu_custom_call.1} parent=31 // pred_check
          %p211 = pneg %p52
        $region34: #{tpu_custom_call.1} parent=31 // pred_check_branch
          %213 = sbr.rel (%p211) target = $region36
        $region35: #{tpu_custom_call.1} parent=31 // pred_region
          %s214 = sand.u32 %s42, 1
          %s215 = scalar_lea.sflag [#allocation3], %s214
          %s216 = sand.u32 %s42, 1
          %s217 = smul.addr %s216, 128
          %s218 = scalar_lea.vmem [#allocation2], %s217
          %s219 = smul.u32 16, %s26
          %s221 = ssub.s32 2048, 2048
          %222 = vsyncadd %s215, %s221
          %s223 = smul.addr %s25, 32
          %s224 = sadd.s32 %s219, %s223
          %s225 = smul.addr %s224, 128
          %s226 = scalar_lea.hbm %s0, %s225
          %s227 = sshll.u32 %s218, 4
          %s228 = int_to_ptr.vmem [resolvable:$true] %s227
          %233 = dma.hbm_to_vmem [thread:$0]  %s226, 2048, %s228, %s215, 128, 128, 8
        $region36: #{tpu_custom_call.1} parent=31 // pred_fallthru
          _
      $region32: #{tpu_custom_call.1} parent=5 // pred_fallthru
        _
      %p234 = scmp.le.s32.totalorder 1, %s18
      %p235 = scmp.lt.s32.totalorder %s18, 5
      %p236 = pnand %p234, %p235
      %p237 = pneg %p236
      // Predicated region
      $region37: #{tpu_custom_call.1} parent=5 // pred_check
        _
      $region38: #{tpu_custom_call.1} parent=5 // pred_check_branch
        %239 = sbr.rel (%p236) target = $region40
      $region39: #{tpu_custom_call.1} parent=5 // pred_region
        %s240 = ssub.s32 %s18, 1
        %s241 = sand.u32 %s45, 1
        %s242 = scalar_lea.sflag [#allocation3], %s241
        %s243 = sand.u32 %s45, 1
        %s244 = smul.addr %s243, 128
        %s245 = scalar_lea.vmem [#allocation2], %s244
        // Predicated region
        $region41: #{tpu_custom_call.1} parent=39 // pred_check
          %p246 = pneg %p58
        $region42: #{tpu_custom_call.1} parent=39 // pred_check_branch
          %248 = sbr.rel (%p246) target = $region44
        $region43: #{tpu_custom_call.1} parent=39 // pred_region
          %249 = dma.done %s242, 2048
        $region44: #{tpu_custom_call.1} parent=39 // pred_fallthru
          _
        // Predicated region
        $region45: #{tpu_custom_call.1} parent=39 // pred_check
          %p250 = pneg %p121
        $region46: #{tpu_custom_call.1} parent=39 // pred_check_branch
          %252 = sbr.rel (%p250) target = $region48
        $region47: #{tpu_custom_call.1} parent=39 // pred_region
          %253 = dma.done [#allocation6], 3072
        $region48: #{tpu_custom_call.1} parent=39 // pred_fallthru
          _
        %s254 = sand.u32 %s45, 1
        %s255 = scalar_lea.sflag [#allocation3], %s254
        %s256 = sand.u32 %s45, 1
        %s257 = smul.addr %s256, 128
        %s258 = scalar_lea.vmem [#allocation2], %s257
        %p259 = pneg %p58
        %p260 = pneg %p55
        %p261 = pneg %p79
        %p262 = pneg %p76
        %p263 = pneg %p100
        %p264 = pneg %p97
        %p265 = pneg %p121
        %p266 = pneg %p118
        %p267 = pneg %p142
        %p268 = pneg %p139
        %p269 = pneg %p170
        %p270 = pneg %p167
        %s271 = sand.u32 %s157, 1
        %s272 = scalar_lea.sflag [#allocation4], %s271
        %s273 = sand.u32 %s157, 1
        %s274 = smul.addr %s273, 192
        %s275 = scalar_lea.vmem [#allocation7], %s274
        %s276 = smul.u32 16, %s28
        %s277 = smul.u32 16, %s28
        %v279 = vld [vmem:[%s245] sm:$0xff]
        %v280 = vld [vmem:[%s245 + $0x8] sm:$0xff]
        %v281 = vld [vmem:[%s245 + $0x10] sm:$0xff]
        %v282 = vld [vmem:[%s245 + $0x18] sm:$0xff]
        %v283 = vld [vmem:[%s245 + $0x20] sm:$0xff]
        %v284 = vld [vmem:[%s245 + $0x28] sm:$0xff]
        %v285 = vld [vmem:[%s245 + $0x30] sm:$0xff]
        %v286 = vld [vmem:[%s245 + $0x38] sm:$0xff]
        %v287 = vld [vmem:[%s245 + $0x40] sm:$0xff]
        %v288 = vld [vmem:[%s245 + $0x48] sm:$0xff]
        %v289 = vld [vmem:[%s245 + $0x50] sm:$0xff]
        %v290 = vld [vmem:[%s245 + $0x58] sm:$0xff]
        %v291 = vld [vmem:[%s245 + $0x60] sm:$0xff]
        %v292 = vld [vmem:[%s245 + $0x68] sm:$0xff]
        %v293 = vld [vmem:[%s245 + $0x70] sm:$0xff]
        %v294 = vld [vmem:[%s245 + $0x78] sm:$0xff]
        %v295 = vld [vmem:[%s1] sm:$0x1]
        %v296 = vld [vmem:[%s2] sm:$0x1]
        %297 = vadd.xlane.f32.xlu0 %v279
        %v298 = vpop.xlane.xlu0 %297
        %299 = vadd.xlane.f32.xlu0 %v280
        %v300 = vpop.xlane.xlu0 %299
        %301 = vadd.xlane.f32.xlu0 %v281
        %v302 = vpop.xlane.xlu0 %301
        %303 = vadd.xlane.f32.xlu0 %v282
        %v304 = vpop.xlane.xlu0 %303
        %305 = vadd.xlane.f32.xlu0 %v283
        %v306 = vpop.xlane.xlu0 %305
        %307 = vadd.xlane.f32.xlu0 %v284
        %v308 = vpop.xlane.xlu0 %307
        %309 = vadd.xlane.f32.xlu0 %v285
        %v310 = vpop.xlane.xlu0 %309
        %311 = vadd.xlane.f32.xlu0 %v286
        %v312 = vpop.xlane.xlu0 %311
        %313 = vadd.xlane.f32.xlu0 %v287
        %v314 = vpop.xlane.xlu0 %313
        %315 = vadd.xlane.f32.xlu0 %v288
        %v316 = vpop.xlane.xlu0 %315
        %317 = vadd.xlane.f32.xlu0 %v289
        %v318 = vpop.xlane.xlu0 %317
        %319 = vadd.xlane.f32.xlu0 %v290
        %v320 = vpop.xlane.xlu0 %319
        %321 = vadd.xlane.f32.xlu0 %v291
        %v322 = vpop.xlane.xlu0 %321
        %323 = vadd.xlane.f32.xlu0 %v292
        %v324 = vpop.xlane.xlu0 %323
        %325 = vadd.xlane.f32.xlu0 %v293
        %v326 = vpop.xlane.xlu0 %325
        %327 = vadd.xlane.f32.xlu0 %v294
        %v328 = vpop.xlane.xlu0 %327
        %v329 = vrcp.pop 128.0
        %v330 = vmul.f32 %v298, %v329
        %v331 = vmul.f32 %v300, %v329
        %v332 = vmul.f32 %v302, %v329
        %v333 = vmul.f32 %v304, %v329
        %v334 = vmul.f32 %v306, %v329
        %v335 = vmul.f32 %v308, %v329
        %v336 = vmul.f32 %v310, %v329
        %v337 = vmul.f32 %v312, %v329
        %v338 = vmul.f32 %v314, %v329
        %v339 = vmul.f32 %v316, %v329
        %v340 = vmul.f32 %v318, %v329
        %v341 = vmul.f32 %v320, %v329
        %v342 = vmul.f32 %v322, %v329
        %v343 = vmul.f32 %v324, %v329
        %v344 = vmul.f32 %v326, %v329
        %v345 = vmul.f32 %v328, %v329
        %v346 = vsub.f32 %v279, %v330
        %v347 = vsub.f32 %v280, %v331
        %v348 = vsub.f32 %v281, %v332
        %v349 = vsub.f32 %v282, %v333
        %v350 = vsub.f32 %v283, %v334
        %v351 = vsub.f32 %v284, %v335
        %v352 = vsub.f32 %v285, %v336
        %v353 = vsub.f32 %v286, %v337
        %v354 = vsub.f32 %v287, %v338
        %v355 = vsub.f32 %v288, %v339
        %v356 = vsub.f32 %v289, %v340
        %v357 = vsub.f32 %v290, %v341
        %v358 = vsub.f32 %v291, %v342
        %v359 = vsub.f32 %v292, %v343
        %v360 = vsub.f32 %v293, %v344
        %v361 = vsub.f32 %v294, %v345
        %v362 = vmul.f32 %v346, %v346
        %v363 = vmul.f32 %v347, %v347
        %v364 = vmul.f32 %v348, %v348
        %v365 = vmul.f32 %v349, %v349
        %v366 = vmul.f32 %v350, %v350
        %v367 = vmul.f32 %v351, %v351
        %v368 = vmul.f32 %v352, %v352
        %v369 = vmul.f32 %v353, %v353
        %v370 = vmul.f32 %v354, %v354
        %v371 = vmul.f32 %v355, %v355
        %v372 = vmul.f32 %v356, %v356
        %v373 = vmul.f32 %v357, %v357
        %v374 = vmul.f32 %v358, %v358
        %v375 = vmul.f32 %v359, %v359
        %v376 = vmul.f32 %v360, %v360
        %v377 = vmul.f32 %v361, %v361
        %378 = vadd.xlane.f32.xlu0 %v362
        %v379 = vpop.xlane.xlu0 %378
        %380 = vadd.xlane.f32.xlu0 %v363
        %v381 = vpop.xlane.xlu0 %380
        %382 = vadd.xlane.f32.xlu0 %v364
        %v383 = vpop.xlane.xlu0 %382
        %384 = vadd.xlane.f32.xlu0 %v365
        %v385 = vpop.xlane.xlu0 %384
        %386 = vadd.xlane.f32.xlu0 %v366
        %v387 = vpop.xlane.xlu0 %386
        %388 = vadd.xlane.f32.xlu0 %v367
        %v389 = vpop.xlane.xlu0 %388
        %390 = vadd.xlane.f32.xlu0 %v368
        %v391 = vpop.xlane.xlu0 %390
        %392 = vadd.xlane.f32.xlu0 %v369
        %v393 = vpop.xlane.xlu0 %392
        %394 = vadd.xlane.f32.xlu0 %v370
        %v395 = vpop.xlane.xlu0 %394
        %396 = vadd.xlane.f32.xlu0 %v371
        %v397 = vpop.xlane.xlu0 %396
        %398 = vadd.xlane.f32.xlu0 %v372
        %v399 = vpop.xlane.xlu0 %398
        %400 = vadd.xlane.f32.xlu0 %v373
        %v401 = vpop.xlane.xlu0 %400
        %402 = vadd.xlane.f32.xlu0 %v374
        %v403 = vpop.xlane.xlu0 %402
        %404 = vadd.xlane.f32.xlu0 %v375
        %v405 = vpop.xlane.xlu0 %404
        %406 = vadd.xlane.f32.xlu0 %v376
        %v407 = vpop.xlane.xlu0 %406
        %408 = vadd.xlane.f32.xlu0 %v377
        %v409 = vpop.xlane.xlu0 %408
        %v410 = vmul.f32 %v379, %v329
        %v411 = vmul.f32 %v381, %v329
        %v412 = vmul.f32 %v383, %v329
        %v413 = vmul.f32 %v385, %v329
        %v414 = vmul.f32 %v387, %v329
        %v415 = vmul.f32 %v389, %v329
        %v416 = vmul.f32 %v391, %v329
        %v417 = vmul.f32 %v393, %v329
        %v418 = vmul.f32 %v395, %v329
        %v419 = vmul.f32 %v397, %v329
        %v420 = vmul.f32 %v399, %v329
        %v421 = vmul.f32 %v401, %v329
        %v422 = vmul.f32 %v403, %v329
        %v423 = vmul.f32 %v405, %v329
        %v424 = vmul.f32 %v407, %v329
        %v425 = vmul.f32 %v409, %v329
        %v426 = vadd.f32 %v410, 1e-05
        %v427 = vadd.f32 %v411, 1e-05
        %v428 = vadd.f32 %v412, 1e-05
        %v429 = vadd.f32 %v413, 1e-05
        %v430 = vadd.f32 %v414, 1e-05
        %v431 = vadd.f32 %v415, 1e-05
        %v432 = vadd.f32 %v416, 1e-05
        %v433 = vadd.f32 %v417, 1e-05
        %v434 = vadd.f32 %v418, 1e-05
        %v435 = vadd.f32 %v419, 1e-05
        %v436 = vadd.f32 %v420, 1e-05
        %v437 = vadd.f32 %v421, 1e-05
        %v438 = vadd.f32 %v422, 1e-05
        %v439 = vadd.f32 %v423, 1e-05
        %v440 = vadd.f32 %v424, 1e-05
        %v441 = vadd.f32 %v425, 1e-05
        %v442 = vrsqrt.pop %v426
        %v443 = vrsqrt.pop %v427
        %v444 = vrsqrt.pop %v428
        %v445 = vrsqrt.pop %v429
        %v446 = vrsqrt.pop %v430
        %v447 = vrsqrt.pop %v431
        %v448 = vrsqrt.pop %v432
        %v449 = vrsqrt.pop %v433
        %v450 = vrsqrt.pop %v434
        %v451 = vrsqrt.pop %v435
        %v452 = vrsqrt.pop %v436
        %v453 = vrsqrt.pop %v437
        %v454 = vrsqrt.pop %v438
        %v455 = vrsqrt.pop %v439
        %v456 = vrsqrt.pop %v440
        %v457 = vrsqrt.pop %v441
        %v458 = vmul.f32 %v346, %v442
        %v459 = vmul.f32 %v347, %v443
        %v460 = vmul.f32 %v348, %v444
        %v461 = vmul.f32 %v349, %v445
        %v462 = vmul.f32 %v350, %v446
        %v463 = vmul.f32 %v351, %v447
        %v464 = vmul.f32 %v352, %v448
        %v465 = vmul.f32 %v353, %v449
        %v466 = vmul.f32 %v354, %v450
        %v467 = vmul.f32 %v355, %v451
        %v468 = vmul.f32 %v356, %v452
        %v469 = vmul.f32 %v357, %v453
        %v470 = vmul.f32 %v358, %v454
        %v471 = vmul.f32 %v359, %v455
        %v472 = vmul.f32 %v360, %v456
        %v473 = vmul.f32 %v361, %v457
        %v475 = vlaneseq
        %v476 = vshrl.u32 %v475, 7
        %v477 = vsub.s32 0, %v476
        %v478 = vrot.slane %v295, %v477
        %v480 = vmul.f32 %v458, %v478
        %v481 = vmul.f32 %v459, %v478
        %v482 = vmul.f32 %v460, %v478
        %v483 = vmul.f32 %v461, %v478
        %v484 = vmul.f32 %v462, %v478
        %v485 = vmul.f32 %v463, %v478
        %v486 = vmul.f32 %v464, %v478
        %v487 = vmul.f32 %v465, %v478
        %v488 = vmul.f32 %v466, %v478
        %v489 = vmul.f32 %v467, %v478
        %v490 = vmul.f32 %v468, %v478
        %v491 = vmul.f32 %v469, %v478
        %v492 = vmul.f32 %v470, %v478
        %v493 = vmul.f32 %v471, %v478
        %v494 = vmul.f32 %v472, %v478
        %v495 = vmul.f32 %v473, %v478
        %v497 = vlaneseq
        %v498 = vshrl.u32 %v497, 7
        %v499 = vsub.s32 0, %v498
        %v500 = vrot.slane %v296, %v499
        %v502 = vadd.f32 %v480, %v500
        %v503 = vadd.f32 %v481, %v500
        %v504 = vadd.f32 %v482, %v500
        %v505 = vadd.f32 %v483, %v500
        %v506 = vadd.f32 %v484, %v500
        %v507 = vadd.f32 %v485, %v500
        %v508 = vadd.f32 %v486, %v500
        %v509 = vadd.f32 %v487, %v500
        %v510 = vadd.f32 %v488, %v500
        %v511 = vadd.f32 %v489, %v500
        %v512 = vadd.f32 %v490, %v500
        %v513 = vadd.f32 %v491, %v500
        %v514 = vadd.f32 %v492, %v500
        %v515 = vadd.f32 %v493, %v500
        %v516 = vadd.f32 %v494, %v500
        %v517 = vadd.f32 %v495, %v500
        %v518 = vpack.c.bf16 %v503, %v502
        %v519 = vpack.c.bf16 %v505, %v504
        %v520 = vpack.c.bf16 %v507, %v506
        %v521 = vpack.c.bf16 %v509, %v508
        %v522 = vpack.c.bf16 %v511, %v510
        %v523 = vpack.c.bf16 %v513, %v512
        %v524 = vpack.c.bf16 %v515, %v514
        %v525 = vpack.c.bf16 %v517, %v516
        %v526 = vld [vmem:[#allocation5] sm:$0xff]
        %v527 = vld [vmem:[#allocation5 + $0x8] sm:$0xf]
        %v528 = vld [vmem:[#allocation5 + $0xc] sm:$0xff]
        %v529 = vld [vmem:[#allocation5 + $0x14] sm:$0xf]
        %v530 = vld [vmem:[#allocation5 + $0x18] sm:$0xff]
        %v531 = vld [vmem:[#allocation5 + $0x20] sm:$0xf]
        %v532 = vld [vmem:[#allocation5 + $0x24] sm:$0xff]
        %v533 = vld [vmem:[#allocation5 + $0x2c] sm:$0xf]
        %v534 = vld [vmem:[#allocation5 + $0x30] sm:$0xff]
        %v535 = vld [vmem:[#allocation5 + $0x38] sm:$0xf]
        %v536 = vld [vmem:[#allocation5 + $0x3c] sm:$0xff]
        %v537 = vld [vmem:[#allocation5 + $0x44] sm:$0xf]
        %v538 = vld [vmem:[#allocation5 + $0x48] sm:$0xff]
        %v539 = vld [vmem:[#allocation5 + $0x50] sm:$0xf]
        %v540 = vld [vmem:[#allocation5 + $0x54] sm:$0xff]
        %v541 = vld [vmem:[#allocation5 + $0x5c] sm:$0xf]
        %v542 = vld [vmem:[#allocation5 + $0x60] sm:$0xff]
        %v543 = vld [vmem:[#allocation5 + $0x68] sm:$0xf]
        %v544 = vld [vmem:[#allocation5 + $0x6c] sm:$0xff]
        %v545 = vld [vmem:[#allocation5 + $0x74] sm:$0xf]
        %v546 = vld [vmem:[#allocation5 + $0x78] sm:$0xff]
        %v547 = vld [vmem:[#allocation5 + $0x80] sm:$0xf]
        %v548 = vld [vmem:[#allocation5 + $0x84] sm:$0xff]
        %v549 = vld [vmem:[#allocation5 + $0x8c] sm:$0xf]
        %v550 = vld [vmem:[#allocation5 + $0x90] sm:$0xff]
        %v551 = vld [vmem:[#allocation5 + $0x98] sm:$0xf]
        %v552 = vld [vmem:[#allocation5 + $0x9c] sm:$0xff]
        %v553 = vld [vmem:[#allocation5 + $0xa4] sm:$0xf]
        %v554 = vld [vmem:[#allocation5 + $0xa8] sm:$0xff]
        %v555 = vld [vmem:[#allocation5 + $0xb0] sm:$0xf]
        %v556 = vld [vmem:[#allocation5 + $0xb4] sm:$0xff]
        %v557 = vld [vmem:[#allocation5 + $0xbc] sm:$0xf]
        %v558 = vld [vmem:[%s4] sm:$0x7]
        %v560 = vlaneseq
        %v561 = vshrl.u32 %v560, 7
        %v562 = vsub.s32 0, %v561
        %v563 = vrot.slane %v558, %v562
        %v564 = vlaneseq
        %v565 = vshrl.u32 %v564, 7
        %v566 = vsub.s32 1, %v565
        %v567 = vrot.slane %v558, %v566
        %v568 = vlaneseq
        %v569 = vshrl.u32 %v568, 7
        %v570 = vsub.s32 2, %v569
        %v571 = vrot.slane %v558, %v570
        %v607 = vunpack.c.l.b16 %v526
        %v608 = vunpack.c.h.b16 %v526
        %v609 = vunpack.c.l.b16 %v527
        %v610 = vunpack.c.l.b16 %v528
        %v611 = vunpack.c.h.b16 %v528
        %v612 = vunpack.c.l.b16 %v529
        %v613 = vunpack.c.l.b16 %v530
        %v614 = vunpack.c.h.b16 %v530
        %v615 = vunpack.c.l.b16 %v531
        %v616 = vunpack.c.l.b16 %v532
        %v617 = vunpack.c.h.b16 %v532
        %v618 = vunpack.c.l.b16 %v533
        %v619 = vunpack.c.l.b16 %v534
        %v620 = vunpack.c.h.b16 %v534
        %v621 = vunpack.c.l.b16 %v535
        %v622 = vunpack.c.l.b16 %v536
        %v623 = vunpack.c.h.b16 %v536
        %v624 = vunpack.c.l.b16 %v537
        %v625 = vunpack.c.l.b16 %v538
        %v626 = vunpack.c.h.b16 %v538
        %v627 = vunpack.c.l.b16 %v539
        %v628 = vunpack.c.l.b16 %v540
        %v629 = vunpack.c.h.b16 %v540
        %v630 = vunpack.c.l.b16 %v541
        %v631 = vunpack.c.l.b16 %v542
        %v632 = vunpack.c.h.b16 %v542
        %v633 = vunpack.c.l.b16 %v543
        %v634 = vunpack.c.l.b16 %v544
        %v635 = vunpack.c.h.b16 %v544
        %v636 = vunpack.c.l.b16 %v545
        %v637 = vunpack.c.l.b16 %v546
        %v638 = vunpack.c.h.b16 %v546
        %v639 = vunpack.c.l.b16 %v547
        %v640 = vunpack.c.l.b16 %v548
        %v641 = vunpack.c.h.b16 %v548
        %v642 = vunpack.c.l.b16 %v549
        %v643 = vunpack.c.l.b16 %v550
        %v644 = vunpack.c.h.b16 %v550
        %v645 = vunpack.c.l.b16 %v551
        %v646 = vunpack.c.l.b16 %v552
        %v647 = vunpack.c.h.b16 %v552
        %v648 = vunpack.c.l.b16 %v553
        %v649 = vunpack.c.l.b16 %v554
        %v650 = vunpack.c.h.b16 %v554
        %v651 = vunpack.c.l.b16 %v555
        %v652 = vunpack.c.l.b16 %v556
        %v653 = vunpack.c.h.b16 %v556
        %v654 = vunpack.c.l.b16 %v557
        %v655 = vpack.c.b16 %v610, %v607
        %v656 = vpack.c.b16 %v611, %v608
        %v657 = vpack.c.b16 %v612, %v609
        %v658 = vpack.c.b16 %v616, %v613
        %v659 = vpack.c.b16 %v617, %v614
        %v660 = vpack.c.b16 %v618, %v615
        %v661 = vpack.c.b16 %v622, %v619
        %v662 = vpack.c.b16 %v623, %v620
        %v663 = vpack.c.b16 %v624, %v621
        %v664 = vpack.c.b16 %v628, %v625
        %v665 = vpack.c.b16 %v629, %v626
        %v666 = vpack.c.b16 %v630, %v627
        %v667 = vpack.c.b16 %v634, %v631
        %v668 = vpack.c.b16 %v635, %v632
        %v669 = vpack.c.b16 %v636, %v633
        %v670 = vpack.c.b16 %v640, %v637
        %v671 = vpack.c.b16 %v641, %v638
        %v672 = vpack.c.b16 %v642, %v639
        %v673 = vpack.c.b16 %v646, %v643
        %v674 = vpack.c.b16 %v647, %v644
        %v675 = vpack.c.b16 %v648, %v645
        %v676 = vpack.c.b16 %v652, %v649
        %v677 = vpack.c.b16 %v653, %v650
        %v678 = vpack.c.b16 %v654, %v651
        %703 = vmatprep.subr.bf16.mxu0 %v677
        %704 = vmatpush1.bf16.msra.mxu0 %v676
        %705 = vmatprep.subr.bf16.mxu0 %v674
        %706 = vmatpush1.bf16.msra.mxu0 %v673
        %707 = vmatprep.subr.bf16.mxu0 %v671
        %708 = vmatpush1.bf16.msra.mxu0 %v670
        %709 = vmatprep.subr.bf16.mxu0 %v668
        %710 = vmatpush1.bf16.msra.mxu0 %v667
        %711 = vmatprep.subr.bf16.mxu0 %v665
        %712 = vmatpush1.bf16.msra.mxu0 %v664
        %713 = vmatprep.subr.bf16.mxu0 %v662
        %714 = vmatpush1.bf16.msra.mxu0 %v661
        %715 = vmatprep.subr.bf16.mxu0 %v659
        %716 = vmatpush1.bf16.msra.mxu0 %v658
        %717 = vmatprep.subr.bf16.mxu0 %v656
        %718 = vmatpush1.bf16.msra.mxu0 %v655
        %719 = vmatprep.subr.bf16.mxu0 0
        %720 = vmatpush2.bf16.msra.mxu0 0
        %721 = vmatprep.subr.bf16.mxu0 0
        %722 = vmatpush2.bf16.msra.mxu0 0
        %723 = vmatprep.subr.bf16.mxu0 0
        %724 = vmatpush2.bf16.msra.mxu0 0
        %725 = vmatprep.subr.bf16.mxu0 0
        %726 = vmatpush2.bf16.msra.mxu0 0
        %727 = vmatprep.subr.bf16.mxu0 0
        %728 = vmatpush2.bf16.msra.mxu0 0
        %729 = vmatprep.subr.bf16.mxu0 0
        %730 = vmatpush2.bf16.msra.mxu0 0
        %731 = vmatprep.subr.bf16.mxu0 0
        %732 = vmatpush2.bf16.msra.mxu0 0
        %733 = vmatprep.subr.bf16.mxu0 0
        %734 = vmatpush2.bf16.msra.mxu0 0
        %735 = vmatprep.mubr.bf16.mxu0 0
        %736 = vmatmul.mubr.bf16.gmra.mxu0 %v518
        %v737 = vpop.f32.mrf.mxu0
        %v738 = vadd.f32 %v563, %v737
        %v739 = vpop.f32.mrf.mxu0
        %v740 = vadd.f32 %v567, %v739
        %v741 = vpop.f32.mrf.mxu0
        %v742 = vadd.f32 %v563, %v741
        %v743 = vpop.f32.mrf.mxu0
        %v744 = vadd.f32 %v567, %v743
        %745 = vmatprep.mubr.bf16.mxu0 0
        %746 = vmatmul.mubr.bf16.gmra.mxu0 %v519
        %v747 = vpop.f32.mrf.mxu0
        %v748 = vadd.f32 %v563, %v747
        %v749 = vpop.f32.mrf.mxu0
        %v750 = vadd.f32 %v567, %v749
        %v751 = vpop.f32.mrf.mxu0
        %v752 = vadd.f32 %v563, %v751
        %v753 = vpop.f32.mrf.mxu0
        %v754 = vadd.f32 %v567, %v753
        %755 = vmatprep.mubr.bf16.mxu0 0
        %756 = vmatmul.mubr.bf16.gmra.mxu0 %v520
        %v757 = vpop.f32.mrf.mxu0
        %v758 = vadd.f32 %v563, %v757
        %v759 = vpop.f32.mrf.mxu0
        %v760 = vadd.f32 %v567, %v759
        %v761 = vpop.f32.mrf.mxu0
        %v762 = vadd.f32 %v563, %v761
        %v763 = vpop.f32.mrf.mxu0
        %v764 = vadd.f32 %v567, %v763
        %765 = vmatprep.mubr.bf16.mxu0 0
        %766 = vmatmul.mubr.bf16.gmra.mxu0 %v521
        %v767 = vpop.f32.mrf.mxu0
        %v768 = vadd.f32 %v563, %v767
        %v769 = vpop.f32.mrf.mxu0
        %v770 = vadd.f32 %v567, %v769
        %v771 = vpop.f32.mrf.mxu0
        %v772 = vadd.f32 %v563, %v771
        %v773 = vpop.f32.mrf.mxu0
        %v774 = vadd.f32 %v567, %v773
        %775 = vmatprep.mubr.bf16.mxu0 0
        %776 = vmatmul.mubr.bf16.gmra.mxu0 %v522
        %v777 = vpop.f32.mrf.mxu0
        %v778 = vadd.f32 %v563, %v777
        %v779 = vpop.f32.mrf.mxu0
        %v780 = vadd.f32 %v567, %v779
        %v781 = vpop.f32.mrf.mxu0
        %v782 = vadd.f32 %v563, %v781
        %v783 = vpop.f32.mrf.mxu0
        %v784 = vadd.f32 %v567, %v783
        %785 = vmatprep.mubr.bf16.mxu0 0
        %786 = vmatmul.mubr.bf16.gmra.mxu0 %v523
        %v787 = vpop.f32.mrf.mxu0
        %v788 = vadd.f32 %v563, %v787
        %v789 = vpop.f32.mrf.mxu0
        %v790 = vadd.f32 %v567, %v789
        %v791 = vpop.f32.mrf.mxu0
        %v792 = vadd.f32 %v563, %v791
        %v793 = vpop.f32.mrf.mxu0
        %v794 = vadd.f32 %v567, %v793
        %795 = vmatprep.mubr.bf16.mxu0 0
        %796 = vmatmul.mubr.bf16.gmra.mxu0 %v524
        %v797 = vpop.f32.mrf.mxu0
        %v798 = vadd.f32 %v563, %v797
        %v799 = vpop.f32.mrf.mxu0
        %v800 = vadd.f32 %v567, %v799
        %v801 = vpop.f32.mrf.mxu0
        %v802 = vadd.f32 %v563, %v801
        %v803 = vpop.f32.mrf.mxu0
        %v804 = vadd.f32 %v567, %v803
        %805 = vmatprep.mubr.bf16.mxu0 0
        %806 = vmatmul.mubr.bf16.gmra.mxu0 %v525
        %v807 = vpop.f32.mrf.mxu0
        %v808 = vadd.f32 %v563, %v807
        %v809 = vpop.f32.mrf.mxu0
        %v810 = vadd.f32 %v567, %v809
        %v811 = vpop.f32.mrf.mxu0
        %v812 = vadd.f32 %v563, %v811
        %v813 = vpop.f32.mrf.mxu0
        %v814 = vadd.f32 %v567, %v813
        %815 = vdwg.mxu0
        %816 = vmatprep.subr.bf16.mxu0 0
        %817 = vmatpush1.bf16.msra.mxu0 %v678
        %818 = vmatprep.subr.bf16.mxu0 0
        %819 = vmatpush1.bf16.msra.mxu0 %v675
        %820 = vmatprep.subr.bf16.mxu0 0
        %821 = vmatpush1.bf16.msra.mxu0 %v672
        %822 = vmatprep.subr.bf16.mxu0 0
        %823 = vmatpush1.bf16.msra.mxu0 %v669
        %824 = vmatprep.subr.bf16.mxu0 0
        %825 = vmatpush1.bf16.msra.mxu0 %v666
        %826 = vmatprep.subr.bf16.mxu0 0
        %827 = vmatpush1.bf16.msra.mxu0 %v663
        %828 = vmatprep.subr.bf16.mxu0 0
        %829 = vmatpush1.bf16.msra.mxu0 %v660
        %830 = vmatprep.subr.bf16.mxu0 0
        %831 = vmatpush1.bf16.msra.mxu0 %v657
        %832 = vmatprep.subr.bf16.mxu0 0
        %833 = vmatpush2.bf16.msra.mxu0 0
        %834 = vmatprep.subr.bf16.mxu0 0
        %835 = vmatpush2.bf16.msra.mxu0 0
        %836 = vmatprep.subr.bf16.mxu0 0
        %837 = vmatpush2.bf16.msra.mxu0 0
        %838 = vmatprep.subr.bf16.mxu0 0
        %839 = vmatpush2.bf16.msra.mxu0 0
        %840 = vmatprep.subr.bf16.mxu0 0
        %841 = vmatpush2.bf16.msra.mxu0 0
        %842 = vmatprep.subr.bf16.mxu0 0
        %843 = vmatpush2.bf16.msra.mxu0 0
        %844 = vmatprep.subr.bf16.mxu0 0
        %845 = vmatpush2.bf16.msra.mxu0 0
        %846 = vmatprep.subr.bf16.mxu0 0
        %847 = vmatpush2.bf16.msra.mxu0 0
        %848 = vmatprep.mubr.bf16.mxu0 0
        %849 = vmatmul.mubr.bf16.gmra.mxu0 %v518
        %v850 = vpop.f32.mrf.mxu0
        %v851 = vadd.f32 %v571, %v850
        %v852 = vpop.f32.mrf.mxu0
        %v853 = vpop.f32.mrf.mxu0
        %v854 = vadd.f32 %v571, %v853
        %v855 = vpop.f32.mrf.mxu0
        %856 = vmatprep.mubr.bf16.mxu0 0
        %857 = vmatmul.mubr.bf16.gmra.mxu0 %v519
        %v858 = vpop.f32.mrf.mxu0
        %v859 = vadd.f32 %v571, %v858
        %v860 = vpop.f32.mrf.mxu0
        %v861 = vpop.f32.mrf.mxu0
        %v862 = vadd.f32 %v571, %v861
        %v863 = vpop.f32.mrf.mxu0
        %864 = vmatprep.mubr.bf16.mxu0 0
        %865 = vmatmul.mubr.bf16.gmra.mxu0 %v520
        %v866 = vpop.f32.mrf.mxu0
        %v867 = vadd.f32 %v571, %v866
        %v868 = vpop.f32.mrf.mxu0
        %v869 = vpop.f32.mrf.mxu0
        %v870 = vadd.f32 %v571, %v869
        %v871 = vpop.f32.mrf.mxu0
        %872 = vmatprep.mubr.bf16.mxu0 0
        %873 = vmatmul.mubr.bf16.gmra.mxu0 %v521
        %v874 = vpop.f32.mrf.mxu0
        %v875 = vadd.f32 %v571, %v874
        %v876 = vpop.f32.mrf.mxu0
        %v877 = vpop.f32.mrf.mxu0
        %v878 = vadd.f32 %v571, %v877
        %v879 = vpop.f32.mrf.mxu0
        %880 = vmatprep.mubr.bf16.mxu0 0
        %881 = vmatmul.mubr.bf16.gmra.mxu0 %v522
        %v882 = vpop.f32.mrf.mxu0
        %v883 = vadd.f32 %v571, %v882
        %v884 = vpop.f32.mrf.mxu0
        %v885 = vpop.f32.mrf.mxu0
        %v886 = vadd.f32 %v571, %v885
        %v887 = vpop.f32.mrf.mxu0
        %888 = vmatprep.mubr.bf16.mxu0 0
        %889 = vmatmul.mubr.bf16.gmra.mxu0 %v523
        %v890 = vpop.f32.mrf.mxu0
        %v891 = vadd.f32 %v571, %v890
        %v892 = vpop.f32.mrf.mxu0
        %v893 = vpop.f32.mrf.mxu0
        %v894 = vadd.f32 %v571, %v893
        %v895 = vpop.f32.mrf.mxu0
        %896 = vmatprep.mubr.bf16.mxu0 0
        %897 = vmatmul.mubr.bf16.gmra.mxu0 %v524
        %v898 = vpop.f32.mrf.mxu0
        %v899 = vadd.f32 %v571, %v898
        %v900 = vpop.f32.mrf.mxu0
        %v901 = vpop.f32.mrf.mxu0
        %v902 = vadd.f32 %v571, %v901
        %v903 = vpop.f32.mrf.mxu0
        %904 = vmatprep.mubr.bf16.mxu0 0
        %905 = vmatmul.mubr.bf16.gmra.mxu0 %v525
        %v906 = vpop.f32.mrf.mxu0
        %v907 = vadd.f32 %v571, %v906
        %v908 = vpop.f32.mrf.mxu0
        %v909 = vpop.f32.mrf.mxu0
        %v910 = vadd.f32 %v571, %v909
        %v911 = vpop.f32.mrf.mxu0
        %912 = vdwg.mxu0
        %v913 = vpack.c.bf16 %v742, %v738
        %v914 = vpack.c.bf16 %v744, %v740
        %v915 = vpack.c.bf16 %v854, %v851
        %v916 = vpack.c.bf16 %v752, %v748
        %v917 = vpack.c.bf16 %v754, %v750
        %v918 = vpack.c.bf16 %v862, %v859
        %v919 = vpack.c.bf16 %v762, %v758
        %v920 = vpack.c.bf16 %v764, %v760
        %v921 = vpack.c.bf16 %v870, %v867
        %v922 = vpack.c.bf16 %v772, %v768
        %v923 = vpack.c.bf16 %v774, %v770
        %v924 = vpack.c.bf16 %v878, %v875
        %v925 = vpack.c.bf16 %v782, %v778
        %v926 = vpack.c.bf16 %v784, %v780
        %v927 = vpack.c.bf16 %v886, %v883
        %v928 = vpack.c.bf16 %v792, %v788
        %v929 = vpack.c.bf16 %v794, %v790
        %v930 = vpack.c.bf16 %v894, %v891
        %v931 = vpack.c.bf16 %v802, %v798
        %v932 = vpack.c.bf16 %v804, %v800
        %v933 = vpack.c.bf16 %v902, %v899
        %v934 = vpack.c.bf16 %v812, %v808
        %v935 = vpack.c.bf16 %v814, %v810
        %v936 = vpack.c.bf16 %v910, %v907
        %v961 = vunpack.c.l.b16 %v913
        %v962 = vunpack.c.l.b16 %v914
        %v963 = vunpack.c.l.b16 %v915
        %v964 = vunpack.c.h.b16 %v913
        %v965 = vunpack.c.h.b16 %v914
        %v966 = vunpack.c.h.b16 %v915
        %v967 = vunpack.c.l.b16 %v916
        %v968 = vunpack.c.l.b16 %v917
        %v969 = vunpack.c.l.b16 %v918
        %v970 = vunpack.c.h.b16 %v916
        %v971 = vunpack.c.h.b16 %v917
        %v972 = vunpack.c.h.b16 %v918
        %v973 = vunpack.c.l.b16 %v919
        %v974 = vunpack.c.l.b16 %v920
        %v975 = vunpack.c.l.b16 %v921
        %v976 = vunpack.c.h.b16 %v919
        %v977 = vunpack.c.h.b16 %v920
        %v978 = vunpack.c.h.b16 %v921
        %v979 = vunpack.c.l.b16 %v922
        %v980 = vunpack.c.l.b16 %v923
        %v981 = vunpack.c.l.b16 %v924
        %v982 = vunpack.c.h.b16 %v922
        %v983 = vunpack.c.h.b16 %v923
        %v984 = vunpack.c.h.b16 %v924
        %v985 = vunpack.c.l.b16 %v925
        %v986 = vunpack.c.l.b16 %v926
        %v987 = vunpack.c.l.b16 %v927
        %v988 = vunpack.c.h.b16 %v925
        %v989 = vunpack.c.h.b16 %v926
        %v990 = vunpack.c.h.b16 %v927
        %v991 = vunpack.c.l.b16 %v928
        %v992 = vunpack.c.l.b16 %v929
        %v993 = vunpack.c.l.b16 %v930
        %v994 = vunpack.c.h.b16 %v928
        %v995 = vunpack.c.h.b16 %v929
        %v996 = vunpack.c.h.b16 %v930
        %v997 = vunpack.c.l.b16 %v931
        %v998 = vunpack.c.l.b16 %v932
        %v999 = vunpack.c.l.b16 %v933
        %v1000 = vunpack.c.h.b16 %v931
        %v1001 = vunpack.c.h.b16 %v932
        %v1002 = vunpack.c.h.b16 %v933
        %v1003 = vunpack.c.l.b16 %v934
        %v1004 = vunpack.c.l.b16 %v935
        %v1005 = vunpack.c.l.b16 %v936
        %v1006 = vunpack.c.h.b16 %v934
        %v1007 = vunpack.c.h.b16 %v935
        %v1008 = vunpack.c.h.b16 %v936
        %v1009 = vpack.c.b16 %v962, %v961
        %v1010 = vpack.c.b16 %v963, %v963
        %v1011 = vpack.c.b16 %v965, %v964
        %v1012 = vpack.c.b16 %v966, %v966
        %v1013 = vpack.c.b16 %v968, %v967
        %v1014 = vpack.c.b16 %v969, %v969
        %v1015 = vpack.c.b16 %v971, %v970
        %v1016 = vpack.c.b16 %v972, %v972
        %v1017 = vpack.c.b16 %v974, %v973
        %v1018 = vpack.c.b16 %v975, %v975
        %v1019 = vpack.c.b16 %v977, %v976
        %v1020 = vpack.c.b16 %v978, %v978
        %v1021 = vpack.c.b16 %v980, %v979
        %v1022 = vpack.c.b16 %v981, %v981
        %v1023 = vpack.c.b16 %v983, %v982
        %v1024 = vpack.c.b16 %v984, %v984
        %v1025 = vpack.c.b16 %v986, %v985
        %v1026 = vpack.c.b16 %v987, %v987
        %v1027 = vpack.c.b16 %v989, %v988
        %v1028 = vpack.c.b16 %v990, %v990
        %v1029 = vpack.c.b16 %v992, %v991
        %v1030 = vpack.c.b16 %v993, %v993
        %v1031 = vpack.c.b16 %v995, %v994
        %v1032 = vpack.c.b16 %v996, %v996
        %v1033 = vpack.c.b16 %v998, %v997
        %v1034 = vpack.c.b16 %v999, %v999
        %v1035 = vpack.c.b16 %v1001, %v1000
        %v1036 = vpack.c.b16 %v1002, %v1002
        %v1037 = vpack.c.b16 %v1004, %v1003
        %v1038 = vpack.c.b16 %v1005, %v1005
        %v1039 = vpack.c.b16 %v1007, %v1006
        %v1040 = vpack.c.b16 %v1008, %v1008
        %1073 = vst [vmem:[%s275] sm:$0xff] %v1009
        %1074 = vst [vmem:[%s275 + $0x8] sm:$0xf] %v1010
        %1075 = vst [vmem:[%s275 + $0xc] sm:$0xff] %v1011
        %1076 = vst [vmem:[%s275 + $0x14] sm:$0xf] %v1012
        %1077 = vst [vmem:[%s275 + $0x18] sm:$0xff] %v1013
        %1078 = vst [vmem:[%s275 + $0x20] sm:$0xf] %v1014
        %1079 = vst [vmem:[%s275 + $0x24] sm:$0xff] %v1015
        %1080 = vst [vmem:[%s275 + $0x2c] sm:$0xf] %v1016
        %1081 = vst [vmem:[%s275 + $0x30] sm:$0xff] %v1017
        %1082 = vst [vmem:[%s275 + $0x38] sm:$0xf] %v1018
        %1083 = vst [vmem:[%s275 + $0x3c] sm:$0xff] %v1019
        %1084 = vst [vmem:[%s275 + $0x44] sm:$0xf] %v1020
        %1085 = vst [vmem:[%s275 + $0x48] sm:$0xff] %v1021
        %1086 = vst [vmem:[%s275 + $0x50] sm:$0xf] %v1022
        %1087 = vst [vmem:[%s275 + $0x54] sm:$0xff] %v1023
        %1088 = vst [vmem:[%s275 + $0x5c] sm:$0xf] %v1024
        %1089 = vst [vmem:[%s275 + $0x60] sm:$0xff] %v1025
        %1090 = vst [vmem:[%s275 + $0x68] sm:$0xf] %v1026
        %1091 = vst [vmem:[%s275 + $0x6c] sm:$0xff] %v1027
        %1092 = vst [vmem:[%s275 + $0x74] sm:$0xf] %v1028
        %1093 = vst [vmem:[%s275 + $0x78] sm:$0xff] %v1029
        %1094 = vst [vmem:[%s275 + $0x80] sm:$0xf] %v1030
        %1095 = vst [vmem:[%s275 + $0x84] sm:$0xff] %v1031
        %1096 = vst [vmem:[%s275 + $0x8c] sm:$0xf] %v1032
        %1097 = vst [vmem:[%s275 + $0x90] sm:$0xff] %v1033
        %1098 = vst [vmem:[%s275 + $0x98] sm:$0xf] %v1034
        %1099 = vst [vmem:[%s275 + $0x9c] sm:$0xff] %v1035
        %1100 = vst [vmem:[%s275 + $0xa4] sm:$0xf] %v1036
        %1101 = vst [vmem:[%s275 + $0xa8] sm:$0xff] %v1037
        %1102 = vst [vmem:[%s275 + $0xb0] sm:$0xf] %v1038
        %1103 = vst [vmem:[%s275 + $0xb4] sm:$0xff] %v1039
        %1104 = vst [vmem:[%s275 + $0xbc] sm:$0xf] %v1040
        %s1105 = sand.u32 %s157, 1
        %s1106 = scalar_lea.sflag [#allocation4], %s1105
        %s1107 = sand.u32 %s157, 1
        %s1108 = smul.addr %s1107, 192
        %s1109 = scalar_lea.vmem [#allocation7], %s1108
        // Predicated region
        $region49: #{tpu_custom_call.1} parent=39 // pred_check
          %p1110 = pneg %p167
        $region50: #{tpu_custom_call.1} parent=39 // pred_check_branch
          %1112 = sbr.rel (%p1110) target = $region52
        $region51: #{tpu_custom_call.1} parent=39 // pred_region
          %s1113 = smul.u32 16, %s28
          %s1115 = ssub.s32 3072, 3072
          %1116 = vsyncadd %s1106, %s1115
          %s1117 = smul.addr %s1113, 3
          %s1118 = smul.addr %s27, 96
          %s1119 = sadd.s32 %s1117, %s1118
          %s1120 = smul.addr %s1119, 64
          %s1121 = scalar_lea.hbm %s5, %s1120
          %s1122 = sshll.u32 %s1109, 4
          %s1123 = int_to_ptr.vmem [resolvable:$true] %s1122
          %1128 = dma.vmem_to_hbm [thread:$0]  %s1123, 3072, %s1121, %s1106, 192, 192, 12
        $region52: #{tpu_custom_call.1} parent=39 // pred_fallthru
          _
      $region40: #{tpu_custom_call.1} parent=5 // pred_fallthru
        _
      %p1129 = scmp.le.s32.totalorder 2, %s18
      // Predicated region
      $region53: #{tpu_custom_call.1} parent=5 // pred_check
        %p1130 = pneg %p1129
      $region54: #{tpu_custom_call.1} parent=5 // pred_check_branch
        %1132 = sbr.rel (%p1130) target = $region56
      $region55: #{tpu_custom_call.1} parent=5 // pred_region
        %s1133 = ssub.s32 %s18, 2
        // Predicated region
        $region57: #{tpu_custom_call.1} parent=55 // pred_check
          %p1134 = pneg %p173
        $region58: #{tpu_custom_call.1} parent=55 // pred_check_branch
          %1136 = sbr.rel (%p1134) target = $region60
        $region59: #{tpu_custom_call.1} parent=55 // pred_region
          %s1137 = sand.u32 %s158, 1
          %s1138 = scalar_lea.sflag [#allocation4], %s1137
          %s1139 = sand.u32 %s158, 1
          %s1140 = smul.addr %s1139, 192
          %s1141 = scalar_lea.vmem [#allocation7], %s1140
          %1142 = dma.done %s1138, 3072
        $region60: #{tpu_custom_call.1} parent=55 // pred_fallthru
          _
      $region56: #{tpu_custom_call.1} parent=5 // pred_fallthru
        _
    $region6: #{tpu_custom_call.1} parent=1 // loop_footer
      %s22 = sadd.s32 1, %s18
    $region7: #{tpu_custom_call.1} parent=1 // loop_footer_branch
      %17 = sbr.rel target = $region3
    $region8: #{tpu_custom_call.1} parent=1 // loop_exit
      _
    %1143 = vsyncpa [#allocation3], 1
    %s1144 = scalar_lea.sflag [#allocation3], 1
    %1145 = vsyncpa %s1144, 1
    %1146 = vsyncpa [#allocation6], 1
    %1147 = vsyncpa [#allocation4], 1
    %s1148 = scalar_lea.sflag [#allocation4], 1
    %1149 = vsyncpa %s1148, 1

</llo_original>
